<compile_context>
chip_gen: v7x
topology: tpu7x:2x2x1
jax: 0.10.0
libtpu: 0.0.40
codegen_flags: <defaults>
</compile_context>

<pallas_src>
import functools

import jax
import jax.numpy as jnp
from jax.experimental import pallas as pl
from jax.experimental.pallas import tpu as pltpu

EPS = 1e-5  # nn.LayerNorm default


def _round_up(n, m):
    return (n + m - 1) // m * m


def prenorm_kernel(x_ref, w_ref, b_ref, o_ref, *, d_true, d_pad):
    # ---- LayerNorm over the true last dim (f32 stats, VPU) ----
    x = x_ref[...].astype(jnp.float32)                        # (T, Dp); padded cols are 0
    inv_d = jnp.float32(1.0 / d_true)
    mean = jnp.sum(x, axis=-1, keepdims=True) * inv_d         # sums over Dp == sums over D
    xc = x - mean                                             # padded cols become -mean
    sumsq = jnp.sum(xc * xc, axis=-1, keepdims=True)
    if d_pad != d_true:
        # each padded column contributed mean^2 to sumsq; subtract (no per-element mask)
        sumsq = sumsq - jnp.float32(d_pad - d_true) * (mean * mean)
    var = sumsq * inv_d                                       # biased, as in torch
    xn = xc * jax.lax.rsqrt(var + jnp.float32(EPS))           # affine folded into W/b
    # ---- fn: Linear on the MXU (bf16 operands, f32 accumulate) ----
    # Padded columns of xn hit zero rows of W, so no masking of xn is needed.
    y = jnp.dot(xn.astype(jnp.bfloat16), w_ref[...],
                preferred_element_type=jnp.float32)
    y = y + b_ref[...]
    o_ref[...] = y.astype(o_ref.dtype)


def prenorm_linear(x, gamma, beta, w, bias, *, row_tile=1024, out_dtype=None):
    """PreNorm(dim, Linear): y = Linear(LayerNorm(x)).

    x: (B, N, D); gamma/beta: (D,); w: (D, D_out) (torch weight transposed); bias: (D_out,).
    out_dtype: optional output dtype (e.g. jnp.bfloat16 to halve output HBM writeback).
    """
    B, N, D = x.shape
    D_out = w.shape[1]
    rows = B * N
    out_dtype = jnp.dtype(x.dtype if out_dtype is None else out_dtype)

    # ---- fold the LayerNorm affine into the linear weights (once per call, tiny) ----
    w32 = w.astype(jnp.float32)
    w_fold = gamma.astype(jnp.float32)[:, None] * w32                         # (D, D_out)
    b_fold = beta.astype(jnp.float32) @ w32 + bias.astype(jnp.float32)        # (D_out,)

    # ---- lane-dense feature dims (padded only when not already 128-aligned) ----
    d_pad = _round_up(D, 128)
    do_pad = _round_up(D_out, 128)

    # ---- dtype-aware sublane multiple (f32: 8, bf16: 16, int8/fp8: 32) ----
    x_itemsize = jnp.dtype(x.dtype).itemsize
    sub = max(8, 32 // x_itemsize)

    # ---- generation-aware VMEM budget ----
    MiB = 1024 * 1024
    try:
        vmem_cap = int(pltpu.get_tpu_info().vmem_capacity_bytes)
    except Exception:
        vmem_cap = 64 * MiB                    # conservative fallback (v7x per-TC)
    if vmem_cap <= 64 * MiB:                   # v7x: 64 MiB per TensorCore
        budget, limit_cap = 24 * MiB, 40 * MiB
    else:                                      # v5e / v6e: 128 MiB physical
        budget, limit_cap = 48 * MiB, 64 * MiB

    # ---- row tiling: large tiles, >= 2 grid steps when rows permit (v7x megacore) ----
    row_tile = min(row_tile, _round_up(rows, sub))
    if rows > sub:
        row_tile = min(row_tile, _round_up(pl.cdiv(rows, 2), sub))
    out_itemsize = out_dtype.itemsize

    def _tile_bytes(t):
        return (2 * t * d_pad * x_itemsize          # x tile, double-buffered
                + 2 * t * do_pad * out_itemsize     # out tile, double-buffered
                + d_pad * do_pad * 2                # folded W (bf16), single-buffered
                + do_pad * 4)                       # folded bias, single-buffered

    while row_tile > sub and _tile_bytes(row_tile) > budget:
        row_tile //= 2
    row_tile = max(sub, (row_tile // sub) * sub)
    vmem_limit = int(min(max(2 * _tile_bytes(row_tile), 32 * MiB), limit_cap))

    # ---- inputs: no HBM copies when already lane-aligned; never pad rows ----
    x2 = x.reshape(rows, D)
    if d_pad != D:
        x2 = jnp.pad(x2, ((0, 0), (0, d_pad - D)))          # feature pad only
    w_p = w_fold
    if d_pad != D or do_pad != D_out:
        w_p = jnp.pad(w_fold, ((0, d_pad - D), (0, do_pad - D_out)))
    w_p = w_p.astype(jnp.bfloat16)
    b_p = jnp.pad(b_fold, (0, do_pad - D_out)) if do_pad != D_out else b_fold
    b_p = b_p.reshape(1, do_pad)

    kernel = functools.partial(prenorm_kernel, d_true=D, d_pad=d_pad)

    out = pl.pallas_call(
        kernel,
        out_shape=jax.ShapeDtypeStruct((rows, do_pad), out_dtype),
        grid_spec=pltpu.PrefetchScalarGridSpec(
            num_scalar_prefetch=0,
            grid=(pl.cdiv(rows, row_tile),),        # ragged last block handled by Pallas
            in_specs=[
                pl.BlockSpec((row_tile, d_pad), lambda i: (i, 0)),            # x (streamed)
                pl.BlockSpec((d_pad, do_pad), lambda i: (0, 0),
                             pipeline_mode=pl.Buffered(1)),                   # W (resident)
                pl.BlockSpec((1, do_pad), lambda i: (0, 0),
                             pipeline_mode=pl.Buffered(1)),                   # bias
            ],
            out_specs=pl.BlockSpec((row_tile, do_pad), lambda i: (i, 0)),
        ),
        compiler_params=pltpu.CompilerParams(
            dimension_semantics=("parallel",),
            vmem_limit_bytes=vmem_limit),
    )(x2, w_p, b_p)

    if do_pad != D_out:
        out = out[:, :D_out]
    return out.reshape(B, N, D_out)


if __name__ == "__main__":
    key = jax.random.PRNGKey(0)
    ks = jax.random.split(key, 10)

    def torch_ref(x, gamma, beta, w, bias):
        mean = jnp.mean(x, axis=-1, keepdims=True)
        var = jnp.mean((x - mean) ** 2, axis=-1, keepdims=True)
        xn = (x - mean) / jnp.sqrt(var + EPS) * gamma + beta
        return xn @ w + bias

    # ---- Case A: 128-aligned features (no pad/slice HBM copies), ragged rows ----
    B, N, D = 2, 13, 128
    x = jax.random.normal(ks[0], (B, N, D), dtype=jnp.float32)
    gamma = 1.0 + 0.1 * jax.random.normal(ks[1], (D,), dtype=jnp.float32)
    beta = 0.05 * jax.random.normal(ks[2], (D,), dtype=jnp.float32)
    w = jax.random.normal(ks[3], (D, D), dtype=jnp.float32) * 0.05
    bias = jax.random.normal(ks[4], (D,), dtype=jnp.float32) * 0.01

    out = prenorm_linear(x, gamma, beta, w, bias)
    jax.block_until_ready(out)

    ref = torch_ref(x, gamma, beta, w, bias)
    assert out.shape == ref.shape
    # loose check vs f32 torch semantics (kernel feeds the MXU bf16 operands)
    assert jnp.allclose(out, ref, atol=2e-2, rtol=2e-2), "case A: mismatch vs f32 reference"
    # matched-numerics check (f32 LayerNorm stats, bf16 matmul, folded affine)
    mean = jnp.mean(x, axis=-1, keepdims=True)
    var = jnp.mean((x - mean) ** 2, axis=-1, keepdims=True)
    xhat = (x - mean) * jax.lax.rsqrt(var + EPS)
    ref_m = jnp.einsum("bnd,de->bne", xhat.astype(jnp.bfloat16),
                       (gamma[:, None] * w).astype(jnp.bfloat16),
                       preferred_element_type=jnp.float32) + (beta @ w + bias)
    assert jnp.allclose(out, ref_m, atol=3e-3, rtol=3e-3), "case A: mismatch vs matched reference"

    # ---- Case B: unaligned features (padded-column path) with bf16 output ----
    B, N, D = 2, 8, 32
    x = jax.random.normal(ks[5], (B, N, D), dtype=jnp.float32)
    gamma = 1.0 + 0.1 * jax.random.normal(ks[6], (D,), dtype=jnp.float32)
    beta = 0.05 * jax.random.normal(ks[7], (D,), dtype=jnp.float32)
    w = jax.random.normal(ks[8], (D, D), dtype=jnp.float32) * 0.05
    bias = jax.random.normal(ks[9], (D,), dtype=jnp.float32) * 0.01

    out_b = prenorm_linear(x, gamma, beta, w, bias, out_dtype=jnp.bfloat16)
    jax.block_until_ready(out_b)
    ref_b = torch_ref(x, gamma, beta, w, bias)
    assert jnp.allclose(out_b.astype(jnp.float32), ref_b, atol=3e-2, rtol=3e-2), \
        "case B: mismatch vs f32 reference"

    # TODO(synk): `fn` is an arbitrary wrapped module in PreNorm; this kernel fuses the
    # representative Linear(dim, dim) case used throughout cross_Transformer.
    print("KERNEL_OK")
</pallas_src>

<mosaic_0001>
module attributes {stable_mosaic.version = 11 : i64} {
  func.func @prenorm_kernel(%arg0: i32, %arg1: memref<16x128xf32, #tpu.memory_space<vmem>>, %arg2: memref<128x128xbf16, #tpu.memory_space<vmem>>, %arg3: memref<1x128xf32, #tpu.memory_space<vmem>>, %arg4: memref<16x128xf32, #tpu.memory_space<vmem>>) attributes {dimension_semantics = [#tpu.dimension_semantics<parallel>], iteration_bounds = array<i64: 2>, scalar_prefetch = 0 : i64, scratch_operands = 0 : i64, tpu.core_type = #tpu.core_type<tc>, window_params = [{transform_indices = @transform_0, window_bounds = array<i64: 16, 128>}, {pipeline_mode = #tpu.pipeline_mode<synchronous>, transform_indices = @transform_1, window_bounds = array<i64: 128, 128>}, {pipeline_mode = #tpu.pipeline_mode<synchronous>, transform_indices = @transform_2, window_bounds = array<i64: 1, 128>}, {transform_indices = @transform_3, window_bounds = array<i64: 16, 128>}]} {
    %c0 = arith.constant 0 : index
    %c0_0 = arith.constant 0 : index
    %0 = vector.load %arg1[%c0, %c0_0] : memref<16x128xf32, #tpu.memory_space<vmem>>, vector<16x128xf32>
    %cst = arith.constant dense<0.000000e+00> : vector<16xf32>
    %1 = vector.multi_reduction <add>, %0, %cst [1] : vector<16x128xf32> to vector<16xf32>
    %2 = vector.shape_cast %1 : vector<16xf32> to vector<16x1xf32>
    %cst_1 = arith.constant 7.812500e-03 : f32
    %3 = vector.broadcast %cst_1 : f32 to vector<16x1xf32>
    %4 = arith.mulf %2, %3 : vector<16x1xf32>
    %5 = vector.broadcast %4 : vector<16x1xf32> to vector<16x128xf32>
    %6 = arith.subf %0, %5 : vector<16x128xf32>
    %7 = arith.mulf %6, %6 : vector<16x128xf32>
    %cst_2 = arith.constant dense<0.000000e+00> : vector<16xf32>
    %8 = vector.multi_reduction <add>, %7, %cst_2 [1] : vector<16x128xf32> to vector<16xf32>
    %9 = vector.shape_cast %8 : vector<16xf32> to vector<16x1xf32>
    %cst_3 = arith.constant 7.812500e-03 : f32
    %10 = vector.broadcast %cst_3 : f32 to vector<16x1xf32>
    %11 = arith.mulf %9, %10 : vector<16x1xf32>
    %cst_4 = arith.constant 9.99999974E-6 : f32
    %12 = vector.broadcast %cst_4 : f32 to vector<16x1xf32>
    %13 = arith.addf %11, %12 : vector<16x1xf32>
    %14 = math.rsqrt %13 : vector<16x1xf32>
    %15 = vector.broadcast %14 : vector<16x1xf32> to vector<16x128xf32>
    %16 = arith.mulf %6, %15 : vector<16x128xf32>
    %17 = arith.truncf %16 : vector<16x128xf32> to vector<16x128xbf16>
    %c0_5 = arith.constant 0 : index
    %c0_6 = arith.constant 0 : index
    %18 = vector.load %arg2[%c0_5, %c0_6] : memref<128x128xbf16, #tpu.memory_space<vmem>>, vector<128x128xbf16>
    %cst_7 = arith.constant dense<0.000000e+00> : vector<16x128xf32>
    %19 = tpu.matmul %17, %18, %cst_7 {dimension_numbers = #tpu.dot_dimension_numbers<[1], [0], [0], [1], [0, 0, 1, 1], [], []>} : vector<16x128xbf16>, vector<128x128xbf16>, vector<16x128xf32> -> vector<16x128xf32>
    %c0_8 = arith.constant 0 : index
    %c0_9 = arith.constant 0 : index
    %20 = vector.load %arg3[%c0_8, %c0_9] : memref<1x128xf32, #tpu.memory_space<vmem>>, vector<1x128xf32>
    %21 = vector.broadcast %20 : vector<1x128xf32> to vector<16x128xf32>
    %22 = arith.addf %19, %21 : vector<16x128xf32>
    %c0_10 = arith.constant 0 : index
    %c0_11 = arith.constant 0 : index
    %23 = vector.load %arg4[%c0_10, %c0_11] : memref<16x128xf32, #tpu.memory_space<vmem>>, vector<16x128xf32>
    tpu.vector_store %arg4[%c0_10, %c0_11], %22 {strides = array<i32>} : memref<16x128xf32, #tpu.memory_space<vmem>>, vector<16x128xf32>,
    return
  }
  func.func @transform_0(%arg0: i32) -> (i32, i32) {
    %c0_i32 = arith.constant 0 : i32
    %c0_i32_0 = arith.constant 0 : i32
    return %arg0, %c0_i32 : i32, i32
  }
  func.func @transform_1(%arg0: i32) -> (i32, i32) {
    %c0_i32 = arith.constant 0 : i32
    %c0_i32_0 = arith.constant 0 : i32
    %c0_i32_1 = arith.constant 0 : i32
    return %c0_i32, %c0_i32_0 : i32, i32
  }
  func.func @transform_2(%arg0: i32) -> (i32, i32) {
    %c0_i32 = arith.constant 0 : i32
    %c0_i32_0 = arith.constant 0 : i32
    %c0_i32_1 = arith.constant 0 : i32
    return %c0_i32, %c0_i32_0 : i32, i32
  }
  func.func @transform_3(%arg0: i32) -> (i32, i32) {
    %c0_i32 = arith.constant 0 : i32
    %c0_i32_0 = arith.constant 0 : i32
    return %arg0, %c0_i32 : i32, i32
  }
}

</mosaic_0001>

<llo_original>
// kernel: tpu_custom_call.1
$region0: #{tpu_custom_call.1}
  #allocation0 [shape = 'u32[]', space=smem, size = 0x4, offset = 0x4, fixed_abs, tag = 'smem constant byte address 0x4 - core index']
  #allocation1 [shape = 'u32[144,128]{1,0:T(1,128)}', space=vmem, size = 0x12000, scoped, tag = 'internal scratch']
  %s0 = inlined_call_operand.hbm [shape: f32[26,128], index: 0, kind: input, shape index: {}]
  %s1 = inlined_call_operand.hbm [shape: bf16[128,128], index: 1, kind: input, shape index: {}]
  %s2 = inlined_call_operand.vmem [shape: f32[1,128], index: 2, kind: input, shape index: {}]
  %s3 = inlined_call_operand.hbm [shape: f32[26,128], index: 3, kind: output, shape index: {}]
  %s4 = sld [smem:[#allocation0]]
  $region53: #{tpu_custom_call.1} parent=0
    _
  %s6 = ssub.s32 1, %s4
  %s7 = scalar_select 0, %s6, %s4
  $region1: #{tpu_custom_call.1} parent=0
    #allocation2 [shape = 'u8[16384]{0}', space=vmem, size = 0x4000, scoped, tag = 'input window, operand 0']
    #allocation3 [shape = 's32[2]{0}', space=sflag, size = 0x8, scoped, tag = 'scoped memory for tpu_custom_call.1']
    #allocation4 [shape = 's32[2]{0}', space=sflag, size = 0x8, scoped, tag = 'scoped memory for tpu_custom_call.1']
    #allocation5 [shape = 'u8[32768]{0}', space=vmem, size = 0x8000, scoped, tag = 'input window, operand 1, single buffered']
    #allocation6 [shape = 's32[1]{0}', space=sflag, size = 0x4, scoped, tag = 'scoped memory for tpu_custom_call.1']
    #allocation7 [shape = 'u8[16384]{0}', space=vmem, size = 0x4000, scoped, tag = 'output window, operand 0']
    %8 = vsyncpa [#allocation3], 0
    %s9 = scalar_lea.sflag [#allocation3], 1
    %10 = vsyncpa %s9, 0
    %11 = vsyncpa [#allocation6], 0
    %12 = vsyncpa [#allocation4], 0
    %s13 = scalar_lea.sflag [#allocation4], 1
    %14 = vsyncpa %s13, 0
    loop: start=0, step=1, limit=4
    $region2: #{tpu_custom_call.1} parent=1 // loop_pre_header
      _
    $region3: #{tpu_custom_call.1} parent=1 // loop_header
      %s16 = sphi 0, %s20
      %p17 = scmp.ge.s32.totalorder %s16, 4
      %s26 = sphi 0, %s28
      %s29 = sphi 0, %s26
      %s30 = sphi 0, %s29
      %s46 = sphi 0, %s30
      %s50 = sphi 0, %s50
      %s52 = sphi 0, %s50
      %s53 = sphi 0, %s52
      %s67 = sphi 0, %s53
      %s71 = sphi 0, %s71
      %s73 = sphi 0, %s71
      %s74 = sphi 0, %s73
      %s88 = sphi 0, %s74
      %s94 = sphi 0, %s96
      %s97 = sphi 0, %s94
      %s98 = sphi 0, %s97
      %s114 = sphi 0, %s98
    $region4: #{tpu_custom_call.1} parent=1 // loop_header_branch
      %19 = sbr.rel (%p17) target = $region8
    $region5: #{tpu_custom_call.1} parent=1 // loop_body
      %s21 = ssub.s32 %s16, 1
      %s22 = ssub.s32 %s16, 2
      %s23 = sadd.s32 %s16, 1
      %s24 = ssub.s32 %s16, %s23
      %p25 = scmp.eq.s32.totalorder %s24, 0
      %s27 = sadd.s32 %s26, 1
      %s28 = scalar_select %p25, %s26, %s27
      %p31 = pneg %p25
      %p32 = scmp.eq.s32.totalorder %s16, 1
      %p33 = por %p31, %p32
      %p34 = scmp.ne.s32.totalorder %s26, %s29
      %p35 = scmp.eq.s32.totalorder %s16, 0
      %p36 = por %p34, %p35
      %p37 = scmp.ne.s32.totalorder %s26, %s29
      %p38 = scmp.eq.s32.totalorder %s21, 1
      %p39 = por %p37, %p38
      %p40 = scmp.ne.s32.totalorder %s29, %s30
      %p41 = scmp.eq.s32.totalorder %s21, 0
      %p42 = por %p40, %p41
      %p43 = scmp.ne.s32.totalorder %s29, %s30
      %p44 = scmp.eq.s32.totalorder %s22, 1
      %p45 = por %p43, %p44
      %p47 = scmp.ne.s32.totalorder %s30, %s46
      %p48 = scmp.eq.s32.totalorder %s22, 0
      %p49 = por %p47, %p48
      %s51 = sadd.s32 %s50, 1
      %p54 = scmp.eq.s32.totalorder %s16, 1
      %p55 = scmp.ne.s32.totalorder %s50, %s52
      %p56 = scmp.eq.s32.totalorder %s16, 0
      %p57 = por %p55, %p56
      %p58 = scmp.ne.s32.totalorder %s50, %s52
      %p59 = scmp.eq.s32.totalorder %s21, 1
      %p60 = por %p58, %p59
      %p61 = scmp.ne.s32.totalorder %s52, %s53
      %p62 = scmp.eq.s32.totalorder %s21, 0
      %p63 = por %p61, %p62
      %p64 = scmp.ne.s32.totalorder %s52, %s53
      %p65 = scmp.eq.s32.totalorder %s22, 1
      %p66 = por %p64, %p65
      %p68 = scmp.ne.s32.totalorder %s53, %s67
      %p69 = scmp.eq.s32.totalorder %s22, 0
      %p70 = por %p68, %p69
      %s72 = sadd.s32 %s71, 1
      %p75 = scmp.eq.s32.totalorder %s16, 1
      %p76 = scmp.ne.s32.totalorder %s71, %s73
      %p77 = scmp.eq.s32.totalorder %s16, 0
      %p78 = por %p76, %p77
      %p79 = scmp.ne.s32.totalorder %s71, %s73
      %p80 = scmp.eq.s32.totalorder %s21, 1
      %p81 = por %p79, %p80
      %p82 = scmp.ne.s32.totalorder %s73, %s74
      %p83 = scmp.eq.s32.totalorder %s21, 0
      %p84 = por %p82, %p83
      %p85 = scmp.ne.s32.totalorder %s73, %s74
      %p86 = scmp.eq.s32.totalorder %s22, 1
      %p87 = por %p85, %p86
      %p89 = scmp.ne.s32.totalorder %s74, %s88
      %p90 = scmp.eq.s32.totalorder %s22, 0
      %p91 = por %p89, %p90
      %s92 = ssub.s32 %s16, %s23
      %p93 = scmp.eq.s32.totalorder %s92, 0
      %s95 = sadd.s32 %s94, 1
      %s96 = scalar_select %p93, %s94, %s95
      %p99 = pneg %p93
      %p100 = scmp.eq.s32.totalorder %s16, 1
      %p101 = por %p99, %p100
      %p102 = scmp.ne.s32.totalorder %s94, %s97
      %p103 = scmp.eq.s32.totalorder %s16, 0
      %p104 = por %p102, %p103
      %p105 = scmp.ne.s32.totalorder %s94, %s97
      %p106 = scmp.eq.s32.totalorder %s21, 1
      %p107 = por %p105, %p106
      %p108 = scmp.ne.s32.totalorder %s97, %s98
      %p109 = scmp.eq.s32.totalorder %s21, 0
      %p110 = por %p108, %p109
      %p111 = scmp.ne.s32.totalorder %s97, %s98
      %p112 = scmp.eq.s32.totalorder %s22, 1
      %p113 = por %p111, %p112
      %p115 = scmp.ne.s32.totalorder %s98, %s114
      %p116 = scmp.eq.s32.totalorder %s22, 0
      %p117 = por %p115, %p116
      %p118 = scmp.le.s32.totalorder 1, %s16
      %p119 = scmp.lt.s32.totalorder %s16, 3
      %p120 = pnand %p118, %p119
      %p121 = pneg %p120
      // Predicated region
      $region9: #{tpu_custom_call.1} parent=5 // pred_check
        _
      $region10: #{tpu_custom_call.1} parent=5 // pred_check_branch
        %123 = sbr.rel (%p120) target = $region12
      $region11: #{tpu_custom_call.1} parent=5 // pred_region
        %s124 = ssub.s32 %s16, 1
        // Predicated region
        $region13: #{tpu_custom_call.1} parent=11 // pred_check
          %p125 = pneg %p63
        $region14: #{tpu_custom_call.1} parent=11 // pred_check_branch
          %127 = sbr.rel (%p125) target = $region16
        $region15: #{tpu_custom_call.1} parent=11 // pred_region
          %s129 = ssub.s32 1024, 1024
          %130 = vsyncadd [#allocation6], %s129
          %s131 = sshll.u32 [#allocation5], 4
          %s132 = int_to_ptr.vmem [resolvable:$true] %s131
          %137 = dma.hbm_to_vmem [thread:$0]  %s1, 1024, %s132, [#allocation6], 64, 64, 4
        $region16: #{tpu_custom_call.1} parent=11 // pred_fallthru
          _
        // Predicated region
        $region17: #{tpu_custom_call.1} parent=11 // pred_check
          %p138 = pneg %p84
        $region18: #{tpu_custom_call.1} parent=11 // pred_check_branch
          %140 = sbr.rel (%p138) target = $region20
        $region19: #{tpu_custom_call.1} parent=11 // pred_region
          _
        $region20: #{tpu_custom_call.1} parent=11 // pred_fallthru
          _
      $region12: #{tpu_custom_call.1} parent=5 // pred_fallthru
        _
      %p141 = scmp.lt.s32.totalorder %s16, 2
      // Predicated region
      $region21: #{tpu_custom_call.1} parent=5 // pred_check
        %p142 = pneg %p141
      $region22: #{tpu_custom_call.1} parent=5 // pred_check_branch
        %144 = sbr.rel (%p142) target = $region24
      $region23: #{tpu_custom_call.1} parent=5 // pred_region
        // Predicated region
        $region25: #{tpu_custom_call.1} parent=23 // pred_check
          %p145 = pneg %p36
        $region26: #{tpu_custom_call.1} parent=23 // pred_check_branch
          %147 = sbr.rel (%p145) target = $region28
        $region27: #{tpu_custom_call.1} parent=23 // pred_region
          %s148 = sand.u32 %s26, 1
          %s149 = scalar_lea.sflag [#allocation3], %s148
          %s150 = sand.u32 %s26, 1
          %s151 = smul.addr %s150, 16
          %s152 = scalar_lea.vmem [#allocation2], %s151
          %s153 = smul.u32 2, %s16
          %s155 = ssub.s32 256, 256
          %156 = vsyncadd %s149, %s155
          %s157 = smul.addr %s153, 128
          %s158 = scalar_lea.hbm %s0, %s157
          %s159 = sshll.u32 %s152, 4
          %s160 = int_to_ptr.vmem [resolvable:$true] %s159
          %165 = dma.hbm_to_vmem [thread:$0]  %s158, 256, %s160, %s149, 128, 128, 8
        $region28: #{tpu_custom_call.1} parent=23 // pred_fallthru
          _
      $region24: #{tpu_custom_call.1} parent=5 // pred_fallthru
        _
      %p166 = scmp.le.s32.totalorder 1, %s16
      %p167 = scmp.lt.s32.totalorder %s16, 3
      %p168 = pnand %p166, %p167
      %p169 = pneg %p168
      // Predicated region
      $region29: #{tpu_custom_call.1} parent=5 // pred_check
        _
      $region30: #{tpu_custom_call.1} parent=5 // pred_check_branch
        %171 = sbr.rel (%p168) target = $region32
      $region31: #{tpu_custom_call.1} parent=5 // pred_region
        %s172 = ssub.s32 %s16, 1
        %s173 = sand.u32 %s29, 1
        %s174 = scalar_lea.sflag [#allocation3], %s173
        %s175 = sand.u32 %s29, 1
        %s176 = smul.addr %s175, 16
        %s177 = scalar_lea.vmem [#allocation2], %s176
        // Predicated region
        $region33: #{tpu_custom_call.1} parent=31 // pred_check
          %p178 = pneg %p42
        $region34: #{tpu_custom_call.1} parent=31 // pred_check_branch
          %180 = sbr.rel (%p178) target = $region36
        $region35: #{tpu_custom_call.1} parent=31 // pred_region
          %181 = dma.done %s174, 256
        $region36: #{tpu_custom_call.1} parent=31 // pred_fallthru
          _
        // Predicated region
        $region37: #{tpu_custom_call.1} parent=31 // pred_check
          %p182 = pneg %p63
        $region38: #{tpu_custom_call.1} parent=31 // pred_check_branch
          %184 = sbr.rel (%p182) target = $region40
        $region39: #{tpu_custom_call.1} parent=31 // pred_region
          %185 = dma.done [#allocation6], 1024
        $region40: #{tpu_custom_call.1} parent=31 // pred_fallthru
          _
        %s186 = sand.u32 %s29, 1
        %s187 = scalar_lea.sflag [#allocation3], %s186
        %s188 = sand.u32 %s29, 1
        %s189 = smul.addr %s188, 16
        %s190 = scalar_lea.vmem [#allocation2], %s189
        %p191 = pneg %p42
        %p192 = pneg %p39
        %p193 = pneg %p63
        %p194 = pneg %p60
        %p195 = pneg %p84
        %p196 = pneg %p81
        %p197 = pneg %p110
        %p198 = pneg %p107
        %s199 = sand.u32 %s97, 1
        %s200 = scalar_lea.sflag [#allocation4], %s199
        %s201 = sand.u32 %s97, 1
        %s202 = smul.addr %s201, 16
        %s203 = scalar_lea.vmem [#allocation7], %s202
        %s204 = smul.u32 2, %s21
        %s205 = smul.u32 2, %s21
        %v207 = vld [vmem:[%s177] sm:$0xff]
        %v208 = vld [vmem:[%s177 + $0x8] sm:$0xff]
        %209 = vadd.xlane.f32.xlu0 %v207
        %v210 = vpop.xlane.xlu0 %209
        %211 = vadd.xlane.f32.xlu0 %v208
        %v212 = vpop.xlane.xlu0 %211
        %v213 = vmul.f32 %v210, 0.0078125
        %v214 = vmul.f32 %v212, 0.0078125
        %v215 = vsub.f32 %v207, %v213
        %v216 = vsub.f32 %v208, %v214
        %v217 = vmul.f32 %v215, %v215
        %v218 = vmul.f32 %v216, %v216
        %219 = vadd.xlane.f32.xlu0 %v217
        %v220 = vpop.xlane.xlu0 %219
        %221 = vadd.xlane.f32.xlu0 %v218
        %v222 = vpop.xlane.xlu0 %221
        %v223 = vmul.f32 %v220, 0.0078125
        %v224 = vmul.f32 %v222, 0.0078125
        %v225 = vadd.f32 %v223, 1e-05
        %v226 = vadd.f32 %v224, 1e-05
        %v227 = vrsqrt.pop %v225
        %v228 = vrsqrt.pop %v226
        %v229 = vmul.f32 %v215, %v227
        %v230 = vmul.f32 %v216, %v228
        %v231 = vpack.c.bf16 %v230, %v229
        %v232 = vld [vmem:[#allocation5] sm:$0xf]
        %v233 = vld [vmem:[#allocation5 + $0x4] sm:$0xf]
        %v234 = vld [vmem:[#allocation5 + $0x8] sm:$0xf]
        %v235 = vld [vmem:[#allocation5 + $0xc] sm:$0xf]
        %v236 = vld [vmem:[#allocation5 + $0x10] sm:$0xf]
        %v237 = vld [vmem:[#allocation5 + $0x14] sm:$0xf]
        %v238 = vld [vmem:[#allocation5 + $0x18] sm:$0xf]
        %v239 = vld [vmem:[#allocation5 + $0x1c] sm:$0xf]
        %v240 = vld [vmem:[#allocation5 + $0x20] sm:$0xf]
        %v241 = vld [vmem:[#allocation5 + $0x24] sm:$0xf]
        %v242 = vld [vmem:[#allocation5 + $0x28] sm:$0xf]
        %v243 = vld [vmem:[#allocation5 + $0x2c] sm:$0xf]
        %v244 = vld [vmem:[#allocation5 + $0x30] sm:$0xf]
        %v245 = vld [vmem:[#allocation5 + $0x34] sm:$0xf]
        %v246 = vld [vmem:[#allocation5 + $0x38] sm:$0xf]
        %v247 = vld [vmem:[#allocation5 + $0x3c] sm:$0xf]
        %v248 = vld [vmem:[%s2] sm:$0x1]
        %v250 = vlaneseq
        %v251 = vshrl.u32 %v250, 7
        %v252 = vsub.s32 0, %v251
        %v253 = vrot.slane %v248, %v252
        %v271 = vunpack.c.l.b16 %v232
        %v272 = vunpack.c.l.b16 %v233
        %v273 = vunpack.c.l.b16 %v234
        %v274 = vunpack.c.l.b16 %v235
        %v275 = vunpack.c.l.b16 %v236
        %v276 = vunpack.c.l.b16 %v237
        %v277 = vunpack.c.l.b16 %v238
        %v278 = vunpack.c.l.b16 %v239
        %v279 = vunpack.c.l.b16 %v240
        %v280 = vunpack.c.l.b16 %v241
        %v281 = vunpack.c.l.b16 %v242
        %v282 = vunpack.c.l.b16 %v243
        %v283 = vunpack.c.l.b16 %v244
        %v284 = vunpack.c.l.b16 %v245
        %v285 = vunpack.c.l.b16 %v246
        %v286 = vunpack.c.l.b16 %v247
        %v287 = vpack.c.b16 %v272, %v271
        %v288 = vpack.c.b16 %v274, %v273
        %v289 = vpack.c.b16 %v276, %v275
        %v290 = vpack.c.b16 %v278, %v277
        %v291 = vpack.c.b16 %v280, %v279
        %v292 = vpack.c.b16 %v282, %v281
        %v293 = vpack.c.b16 %v284, %v283
        %v294 = vpack.c.b16 %v286, %v285
        %303 = vmatprep.subr.bf16.mxu0 0
        %304 = vmatpush1.bf16.msra.mxu0 %v287
        %305 = vmatprep.subr.bf16.mxu0 0
        %306 = vmatpush1.bf16.msra.mxu0 %v288
        %307 = vmatprep.subr.bf16.mxu0 0
        %308 = vmatpush1.bf16.msra.mxu0 %v289
        %309 = vmatprep.subr.bf16.mxu0 0
        %310 = vmatpush1.bf16.msra.mxu0 %v290
        %311 = vmatprep.subr.bf16.mxu0 0
        %312 = vmatpush1.bf16.msra.mxu0 %v291
        %313 = vmatprep.subr.bf16.mxu0 0
        %314 = vmatpush1.bf16.msra.mxu0 %v292
        %315 = vmatprep.subr.bf16.mxu0 0
        %316 = vmatpush1.bf16.msra.mxu0 %v293
        %317 = vmatprep.subr.bf16.mxu0 0
        %318 = vmatpush1.bf16.msra.mxu0 %v294
        %319 = vmatprep.subr.bf16.mxu0 0
        %320 = vmatpush1.bf16.msra.mxu0 0
        %321 = vmatprep.subr.bf16.mxu0 0
        %322 = vmatpush1.bf16.msra.mxu0 0
        %323 = vmatprep.subr.bf16.mxu0 0
        %324 = vmatpush1.bf16.msra.mxu0 0
        %325 = vmatprep.subr.bf16.mxu0 0
        %326 = vmatpush1.bf16.msra.mxu0 0
        %327 = vmatprep.subr.bf16.mxu0 0
        %328 = vmatpush1.bf16.msra.mxu0 0
        %329 = vmatprep.subr.bf16.mxu0 0
        %330 = vmatpush1.bf16.msra.mxu0 0
        %331 = vmatprep.subr.bf16.mxu0 0
        %332 = vmatpush1.bf16.msra.mxu0 0
        %333 = vmatprep.subr.bf16.mxu0 0
        %334 = vmatpush1.bf16.msra.mxu0 0
        %335 = vmatprep.mubr.bf16.mxu0 0
        %336 = vmatmul.mubr.bf16.gmra.mrb[0].mxu0 %v231
        %v337 = vpop.f32.mrb[0].mxu0
        %v338 = vadd.f32 %v253, %v337
        %v339 = vpop.f32.mrb[0].mxu0
        %v340 = vpop.f32.mrb[0].mxu0
        %v341 = vadd.f32 %v253, %v340
        %v342 = vpop.f32.mrb[0].mxu0
        %343 = vdwg.mxu0
        %344 = vst [vmem:[%s203] sm:$0xff] %v338
        %345 = vst [vmem:[%s203 + $0x8] sm:$0xff] %v341
        %s346 = sand.u32 %s97, 1
        %s347 = scalar_lea.sflag [#allocation4], %s346
        %s348 = sand.u32 %s97, 1
        %s349 = smul.addr %s348, 16
        %s350 = scalar_lea.vmem [#allocation7], %s349
        // Predicated region
        $region41: #{tpu_custom_call.1} parent=31 // pred_check
          %p351 = pneg %p107
        $region42: #{tpu_custom_call.1} parent=31 // pred_check_branch
          %353 = sbr.rel (%p351) target = $region44
        $region43: #{tpu_custom_call.1} parent=31 // pred_region
          %s354 = smul.u32 2, %s21
          %s356 = ssub.s32 256, 256
          %357 = vsyncadd %s347, %s356
          %s358 = smul.addr %s354, 128
          %s359 = scalar_lea.hbm %s3, %s358
          %s360 = sshll.u32 %s350, 4
          %s361 = int_to_ptr.vmem [resolvable:$true] %s360
          %366 = dma.vmem_to_hbm [thread:$0]  %s361, 256, %s359, %s347, 128, 128, 8
        $region44: #{tpu_custom_call.1} parent=31 // pred_fallthru
          _
      $region32: #{tpu_custom_call.1} parent=5 // pred_fallthru
        _
      %p367 = scmp.le.s32.totalorder 2, %s16
      // Predicated region
      $region45: #{tpu_custom_call.1} parent=5 // pred_check
        %p368 = pneg %p367
      $region46: #{tpu_custom_call.1} parent=5 // pred_check_branch
        %370 = sbr.rel (%p368) target = $region48
      $region47: #{tpu_custom_call.1} parent=5 // pred_region
        %s371 = ssub.s32 %s16, 2
        // Predicated region
        $region49: #{tpu_custom_call.1} parent=47 // pred_check
          %p372 = pneg %p113
        $region50: #{tpu_custom_call.1} parent=47 // pred_check_branch
          %374 = sbr.rel (%p372) target = $region52
        $region51: #{tpu_custom_call.1} parent=47 // pred_region
          %s375 = sand.u32 %s98, 1
          %s376 = scalar_lea.sflag [#allocation4], %s375
          %s377 = sand.u32 %s98, 1
          %s378 = smul.addr %s377, 16
          %s379 = scalar_lea.vmem [#allocation7], %s378
          %380 = dma.done %s376, 256
        $region52: #{tpu_custom_call.1} parent=47 // pred_fallthru
          _
      $region48: #{tpu_custom_call.1} parent=5 // pred_fallthru
        _
    $region6: #{tpu_custom_call.1} parent=1 // loop_footer
      %s20 = sadd.s32 1, %s16
    $region7: #{tpu_custom_call.1} parent=1 // loop_footer_branch
      %15 = sbr.rel target = $region3
    $region8: #{tpu_custom_call.1} parent=1 // loop_exit
      _
    %381 = vsyncpa [#allocation3], 1
    %s382 = scalar_lea.sflag [#allocation3], 1
    %383 = vsyncpa %s382, 1
    %384 = vsyncpa [#allocation6], 1
    %385 = vsyncpa [#allocation4], 1
    %s386 = scalar_lea.sflag [#allocation4], 1
    %387 = vsyncpa %s386, 1

</llo_original>
